<compile_context>
chip_gen: v7x
topology: tpu7x:2x2x1
jax: 0.10.0
libtpu: 0.0.40
codegen_flags: <defaults>
</compile_context>

<pallas_src>
import jax
import jax.numpy as jnp
from jax.experimental import pallas as pl
from jax.experimental.pallas import tpu as pltpu


def _mlp_kernel(x_ref, w0_ref, b0_ref, w1_ref, b1_ref, w2_ref, b2_ref, o_ref):
    """Fused 3-layer MLP on one batch tile: relu(relu(x@W0+b0)@W1+b1)@W2+b2."""
    x = x_ref[...]  # (TB, K_pad) float32

    h0 = jnp.dot(x, w0_ref[...], preferred_element_type=jnp.float32) + b0_ref[...]
    h0 = jnp.maximum(h0, 0.0)

    h1 = jnp.dot(h0, w1_ref[...], preferred_element_type=jnp.float32) + b1_ref[...]
    h1 = jnp.maximum(h1, 0.0)

    out = jnp.dot(h1, w2_ref[...], preferred_element_type=jnp.float32) + b2_ref[...]
    o_ref[...] = out.astype(o_ref.dtype)


def _round_up(x, m):
    return ((x + m - 1) // m) * m


def critic_dm_encoder(dm, params, *, block_batch=1024):
    """Run the fused encoder MLP on a batch of depth maps.

    dm:     (batch, num_encoder_obs) float32
    params: dict with w0,b0,w1,b1,w2,b2; weights are (in, out), biases (1, out)
    block_batch: target batch tile (rows per grid step); multiple of 8.
                 1024-4096 is a good range for large RL batches; it is clamped
                 down automatically for small batches.
    """
    batch, in_dim = dm.shape
    w0, b0 = params["w0"], params["b0"]
    w1, b1 = params["w1"], params["b1"]
    w2, b2 = params["w2"], params["b2"]
    h0_dim, h1_dim, out_dim = w0.shape[1], w1.shape[1], w2.shape[1]

    # --- lane-pad the feature (K) dimension: 187 -> 256 --------------------
    k_pad = _round_up(in_dim, 128)
    if k_pad != in_dim:
        dm = jnp.pad(dm, ((0, 0), (0, k_pad - in_dim)))
        w0 = jnp.pad(w0, ((0, k_pad - in_dim), (0, 0)))  # zero rows -> exact result

    # --- pick batch tile and pad batch to a multiple of it -----------------
    tb = min(block_batch, _round_up(max(batch, 1), 8))
    tb = _round_up(tb, 8)
    padded_batch = _round_up(batch, tb)
    if padded_batch != batch:
        dm = jnp.pad(dm, ((0, padded_batch - batch), (0, 0)))

    grid = (padded_batch // tb,)

    # x / out tiles march along the batch axis; weights & biases are constant
    # blocks (DMA'd once, resident in VMEM across all grid steps).
    x_spec = pl.BlockSpec((tb, k_pad), lambda i: (i, 0))
    w0_spec = pl.BlockSpec((k_pad, h0_dim), lambda i: (0, 0))
    b0_spec = pl.BlockSpec((1, h0_dim), lambda i: (0, 0))
    w1_spec = pl.BlockSpec((h0_dim, h1_dim), lambda i: (0, 0))
    b1_spec = pl.BlockSpec((1, h1_dim), lambda i: (0, 0))
    w2_spec = pl.BlockSpec((h1_dim, out_dim), lambda i: (0, 0))
    b2_spec = pl.BlockSpec((1, out_dim), lambda i: (0, 0))
    out_spec = pl.BlockSpec((tb, out_dim), lambda i: (i, 0))

    out = pl.pallas_call(
        _mlp_kernel,
        out_shape=jax.ShapeDtypeStruct((padded_batch, out_dim), jnp.float32),
        grid=grid,
        in_specs=[x_spec, w0_spec, b0_spec, w1_spec, b1_spec, w2_spec, b2_spec],
        out_specs=out_spec,
        compiler_params=pltpu.CompilerParams(
            dimension_semantics=("parallel",),
        ),
    )(dm, w0, b0, w1, b1, w2, b2)

    return out[:batch]


def init_params(key, num_encoder_obs, encoder_hidden_dims):
    """Deterministic PyTorch-Linear-style init: U(-1/sqrt(fan_in), 1/sqrt(fan_in))."""
    dims = [num_encoder_obs] + list(encoder_hidden_dims)
    params = {}
    keys = jax.random.split(key, 2 * (len(dims) - 1))
    for i in range(len(dims) - 1):
        fan_in, fan_out = dims[i], dims[i + 1]
        bound = 1.0 / jnp.sqrt(jnp.float32(fan_in))
        w = jax.random.uniform(keys[2 * i], (fan_in, fan_out),
                               minval=-bound, maxval=bound, dtype=jnp.float32)
        b = jax.random.uniform(keys[2 * i + 1], (1, fan_out),
                               minval=-bound, maxval=bound, dtype=jnp.float32)
        params[f"w{i}"] = w
        params[f"b{i}"] = b
    return params


def reference_forward(dm, params):
    """Plain-JAX reference for correctness checking."""
    h = jnp.maximum(dm @ params["w0"] + params["b0"], 0.0)
    h = jnp.maximum(h @ params["w1"] + params["b1"], 0.0)
    return h @ params["w2"] + params["b2"]


if __name__ == "__main__":
    key = jax.random.PRNGKey(0)
    k_param, k_input = jax.random.split(key)

    # Small shapes consistent with the module: depth map of 187 values,
    # encoder_hidden_dims like [64, 32, 16].
    batch = 2
    num_encoder_obs = 187
    encoder_hidden_dims = [64, 32, 16]

    params = init_params(k_param, num_encoder_obs, encoder_hidden_dims)
    dm = jax.random.normal(k_input, (batch, num_encoder_obs), dtype=jnp.float32)

    out = critic_dm_encoder(dm, params)
    out = jax.block_until_ready(out)

    ref = reference_forward(dm, params)
    assert out.shape == (batch, encoder_hidden_dims[-1])
    assert jnp.allclose(out, ref, atol=1e-5, rtol=1e-5), "Pallas output mismatch vs reference"

    print("KERNEL_OK")
</pallas_src>

<mosaic_0001>
module attributes {stable_mosaic.version = 11 : i64} {
  func.func @_mlp_kernel(%arg0: i32, %arg1: memref<8x256xf32, #tpu.memory_space<vmem>>, %arg2: memref<256x64xf32, #tpu.memory_space<vmem>>, %arg3: memref<1x64xf32, #tpu.memory_space<vmem>>, %arg4: memref<64x32xf32, #tpu.memory_space<vmem>>, %arg5: memref<1x32xf32, #tpu.memory_space<vmem>>, %arg6: memref<32x16xf32, #tpu.memory_space<vmem>>, %arg7: memref<1x16xf32, #tpu.memory_space<vmem>>, %arg8: memref<8x16xf32, #tpu.memory_space<vmem>>) attributes {dimension_semantics = [#tpu.dimension_semantics<parallel>], iteration_bounds = array<i64: 1>, scalar_prefetch = 0 : i64, scratch_operands = 0 : i64, tpu.core_type = #tpu.core_type<tc>, window_params = [{transform_indices = @transform_0, window_bounds = array<i64: 8, 256>}, {pipeline_mode = #tpu.pipeline_mode<synchronous>, transform_indices = @transform_1, window_bounds = array<i64: 256, 64>}, {pipeline_mode = #tpu.pipeline_mode<synchronous>, transform_indices = @transform_2, window_bounds = array<i64: 1, 64>}, {pipeline_mode = #tpu.pipeline_mode<synchronous>, transform_indices = @transform_3, window_bounds = array<i64: 64, 32>}, {pipeline_mode = #tpu.pipeline_mode<synchronous>, transform_indices = @transform_4, window_bounds = array<i64: 1, 32>}, {pipeline_mode = #tpu.pipeline_mode<synchronous>, transform_indices = @transform_5, window_bounds = array<i64: 32, 16>}, {pipeline_mode = #tpu.pipeline_mode<synchronous>, transform_indices = @transform_6, window_bounds = array<i64: 1, 16>}, {transform_indices = @transform_7, window_bounds = array<i64: 8, 16>}]} {
    %c0 = arith.constant 0 : index
    %c0_0 = arith.constant 0 : index
    %0 = vector.load %arg1[%c0, %c0_0] : memref<8x256xf32, #tpu.memory_space<vmem>>, vector<8x256xf32>
    %c0_1 = arith.constant 0 : index
    %c0_2 = arith.constant 0 : index
    %1 = vector.load %arg2[%c0_1, %c0_2] : memref<256x64xf32, #tpu.memory_space<vmem>>, vector<256x64xf32>
    %cst = arith.constant dense<0.000000e+00> : vector<8x64xf32>
    %2 = tpu.matmul %0, %1, %cst {dimension_numbers = #tpu.dot_dimension_numbers<[1], [0], [0], [1], [0, 0, 1, 1], [], []>} : vector<8x256xf32>, vector<256x64xf32>, vector<8x64xf32> -> vector<8x64xf32>
    %c0_3 = arith.constant 0 : index
    %c0_4 = arith.constant 0 : index
    %3 = vector.load %arg3[%c0_3, %c0_4] : memref<1x64xf32, #tpu.memory_space<vmem>>, vector<1x64xf32>
    %4 = vector.broadcast %3 : vector<1x64xf32> to vector<8x64xf32>
    %5 = arith.addf %2, %4 : vector<8x64xf32>
    %cst_5 = arith.constant 0.000000e+00 : f32
    %6 = vector.broadcast %cst_5 : f32 to vector<8x64xf32>
    %7 = arith.maximumf %5, %6 : vector<8x64xf32>
    %c0_6 = arith.constant 0 : index
    %c0_7 = arith.constant 0 : index
    %8 = vector.load %arg4[%c0_6, %c0_7] : memref<64x32xf32, #tpu.memory_space<vmem>>, vector<64x32xf32>
    %cst_8 = arith.constant dense<0.000000e+00> : vector<8x32xf32>
    %9 = tpu.matmul %7, %8, %cst_8 {dimension_numbers = #tpu.dot_dimension_numbers<[1], [0], [0], [1], [0, 0, 1, 1], [], []>} : vector<8x64xf32>, vector<64x32xf32>, vector<8x32xf32> -> vector<8x32xf32>
    %c0_9 = arith.constant 0 : index
    %c0_10 = arith.constant 0 : index
    %10 = vector.load %arg5[%c0_9, %c0_10] : memref<1x32xf32, #tpu.memory_space<vmem>>, vector<1x32xf32>
    %11 = vector.broadcast %10 : vector<1x32xf32> to vector<8x32xf32>
    %12 = arith.addf %9, %11 : vector<8x32xf32>
    %cst_11 = arith.constant 0.000000e+00 : f32
    %13 = vector.broadcast %cst_11 : f32 to vector<8x32xf32>
    %14 = arith.maximumf %12, %13 : vector<8x32xf32>
    %c0_12 = arith.constant 0 : index
    %c0_13 = arith.constant 0 : index
    %15 = vector.load %arg6[%c0_12, %c0_13] : memref<32x16xf32, #tpu.memory_space<vmem>>, vector<32x16xf32>
    %cst_14 = arith.constant dense<0.000000e+00> : vector<8x16xf32>
    %16 = tpu.matmul %14, %15, %cst_14 {dimension_numbers = #tpu.dot_dimension_numbers<[1], [0], [0], [1], [0, 0, 1, 1], [], []>} : vector<8x32xf32>, vector<32x16xf32>, vector<8x16xf32> -> vector<8x16xf32>
    %c0_15 = arith.constant 0 : index
    %c0_16 = arith.constant 0 : index
    %17 = vector.load %arg7[%c0_15, %c0_16] : memref<1x16xf32, #tpu.memory_space<vmem>>, vector<1x16xf32>
    %18 = vector.broadcast %17 : vector<1x16xf32> to vector<8x16xf32>
    %19 = arith.addf %16, %18 : vector<8x16xf32>
    %c0_17 = arith.constant 0 : index
    %c0_18 = arith.constant 0 : index
    %20 = vector.load %arg8[%c0_17, %c0_18] : memref<8x16xf32, #tpu.memory_space<vmem>>, vector<8x16xf32>
    tpu.vector_store %arg8[%c0_17, %c0_18], %19 {strides = array<i32>} : memref<8x16xf32, #tpu.memory_space<vmem>>, vector<8x16xf32>,
    return
  }
  func.func @transform_0(%arg0: i32) -> (i32, i32) {
    %c0_i32 = arith.constant 0 : i32
    %c0_i32_0 = arith.constant 0 : i32
    return %arg0, %c0_i32 : i32, i32
  }
  func.func @transform_1(%arg0: i32) -> (i32, i32) {
    %c0_i32 = arith.constant 0 : i32
    %c0_i32_0 = arith.constant 0 : i32
    %c0_i32_1 = arith.constant 0 : i32
    return %c0_i32, %c0_i32_0 : i32, i32
  }
  func.func @transform_2(%arg0: i32) -> (i32, i32) {
    %c0_i32 = arith.constant 0 : i32
    %c0_i32_0 = arith.constant 0 : i32
    %c0_i32_1 = arith.constant 0 : i32
    return %c0_i32, %c0_i32_0 : i32, i32
  }
  func.func @transform_3(%arg0: i32) -> (i32, i32) {
    %c0_i32 = arith.constant 0 : i32
    %c0_i32_0 = arith.constant 0 : i32
    %c0_i32_1 = arith.constant 0 : i32
    return %c0_i32, %c0_i32_0 : i32, i32
  }
  func.func @transform_4(%arg0: i32) -> (i32, i32) {
    %c0_i32 = arith.constant 0 : i32
    %c0_i32_0 = arith.constant 0 : i32
    %c0_i32_1 = arith.constant 0 : i32
    return %c0_i32, %c0_i32_0 : i32, i32
  }
  func.func @transform_5(%arg0: i32) -> (i32, i32) {
    %c0_i32 = arith.constant 0 : i32
    %c0_i32_0 = arith.constant 0 : i32
    %c0_i32_1 = arith.constant 0 : i32
    return %c0_i32, %c0_i32_0 : i32, i32
  }
  func.func @transform_6(%arg0: i32) -> (i32, i32) {
    %c0_i32 = arith.constant 0 : i32
    %c0_i32_0 = arith.constant 0 : i32
    %c0_i32_1 = arith.constant 0 : i32
    return %c0_i32, %c0_i32_0 : i32, i32
  }
  func.func @transform_7(%arg0: i32) -> (i32, i32) {
    %c0_i32 = arith.constant 0 : i32
    %c0_i32_0 = arith.constant 0 : i32
    return %arg0, %c0_i32 : i32, i32
  }
}

</mosaic_0001>

<llo_original>
// kernel: tpu_custom_call.1
$region0: #{tpu_custom_call.1}
  #allocation0 [shape = 'u32[]', space=smem, size = 0x4, offset = 0x4, fixed_abs, tag = 'smem constant byte address 0x4 - core index']
  #allocation1 [shape = 'u32[144,128]{1,0:T(1,128)}', space=vmem, size = 0x12000, scoped, tag = 'internal scratch']
  %s0 = inlined_call_operand.vmem [shape: f32[8,256], index: 0, kind: input, shape index: {}]
  %s1 = inlined_call_operand.vmem [shape: f32[256,64], index: 1, kind: input, shape index: {}]
  %s2 = inlined_call_operand.vmem [shape: f32[1,64], index: 2, kind: input, shape index: {}]
  %s3 = inlined_call_operand.vmem [shape: f32[64,32], index: 3, kind: input, shape index: {}]
  %s4 = inlined_call_operand.vmem [shape: f32[1,32], index: 4, kind: input, shape index: {}]
  %s5 = inlined_call_operand.vmem [shape: f32[32,16], index: 5, kind: input, shape index: {}]
  %s6 = inlined_call_operand.vmem [shape: f32[1,16], index: 6, kind: input, shape index: {}]
  %s7 = inlined_call_operand.hbm [shape: f32[8,16], index: 7, kind: output, shape index: {}]
  %s8 = sld [smem:[#allocation0]]
  $region38: #{tpu_custom_call.1} parent=0
    _
  %s10 = ssub.s32 1, %s8
  %s11 = scalar_select 0, %s10, %s8
  $region1: #{tpu_custom_call.1} parent=0
    #allocation2 [shape = 'u8[4096]{0}', space=vmem, size = 0x1000, scoped, tag = 'output window, operand 0, single buffered']
    #allocation3 [shape = 's32[1]{0}', space=sflag, size = 0x4, scoped, tag = 'scoped memory for tpu_custom_call.1']
    %12 = vsyncpa [#allocation3], 0
    // Predicated region
    $region2: #{tpu_custom_call.1} parent=1 // pred_check
      _
    $region3: #{tpu_custom_call.1} parent=1 // pred_check_branch
      %14 = sbr.rel (0) target = $region5
    $region4: #{tpu_custom_call.1} parent=1 // pred_region
      _
    $region5: #{tpu_custom_call.1} parent=1 // pred_fallthru
      _
    // Predicated region
    $region6: #{tpu_custom_call.1} parent=1 // pred_check
      _
    $region7: #{tpu_custom_call.1} parent=1 // pred_check_branch
      %16 = sbr.rel (0) target = $region9
    $region8: #{tpu_custom_call.1} parent=1 // pred_region
      _
    $region9: #{tpu_custom_call.1} parent=1 // pred_fallthru
      _
    // Predicated region
    $region10: #{tpu_custom_call.1} parent=1 // pred_check
      _
    $region11: #{tpu_custom_call.1} parent=1 // pred_check_branch
      %18 = sbr.rel (0) target = $region13
    $region12: #{tpu_custom_call.1} parent=1 // pred_region
      _
    $region13: #{tpu_custom_call.1} parent=1 // pred_fallthru
      _
    // Predicated region
    $region14: #{tpu_custom_call.1} parent=1 // pred_check
      _
    $region15: #{tpu_custom_call.1} parent=1 // pred_check_branch
      %20 = sbr.rel (0) target = $region17
    $region16: #{tpu_custom_call.1} parent=1 // pred_region
      _
    $region17: #{tpu_custom_call.1} parent=1 // pred_fallthru
      _
    // Predicated region
    $region18: #{tpu_custom_call.1} parent=1 // pred_check
      _
    $region19: #{tpu_custom_call.1} parent=1 // pred_check_branch
      %22 = sbr.rel (0) target = $region21
    $region20: #{tpu_custom_call.1} parent=1 // pred_region
      _
    $region21: #{tpu_custom_call.1} parent=1 // pred_fallthru
      _
    // Predicated region
    $region22: #{tpu_custom_call.1} parent=1 // pred_check
      _
    $region23: #{tpu_custom_call.1} parent=1 // pred_check_branch
      %24 = sbr.rel (0) target = $region25
    $region24: #{tpu_custom_call.1} parent=1 // pred_region
      _
    $region25: #{tpu_custom_call.1} parent=1 // pred_fallthru
      _
    // Predicated region
    $region26: #{tpu_custom_call.1} parent=1 // pred_check
      _
    $region27: #{tpu_custom_call.1} parent=1 // pred_check_branch
      %26 = sbr.rel (0) target = $region29
    $region28: #{tpu_custom_call.1} parent=1 // pred_region
      _
    $region29: #{tpu_custom_call.1} parent=1 // pred_fallthru
      _
    %v27 = vld [vmem:[%s0] sm:$0xff]
    %v28 = vld [vmem:[%s0 + $0x8] sm:$0xff]
    %v29 = vld [vmem:[%s1] sm:$0xff]
    %v30 = vld [vmem:[%s1 + $0x8] sm:$0xff]
    %v31 = vld [vmem:[%s1 + $0x10] sm:$0xff]
    %v32 = vld [vmem:[%s1 + $0x18] sm:$0xff]
    %v33 = vld [vmem:[%s1 + $0x20] sm:$0xff]
    %v34 = vld [vmem:[%s1 + $0x28] sm:$0xff]
    %v35 = vld [vmem:[%s1 + $0x30] sm:$0xff]
    %v36 = vld [vmem:[%s1 + $0x38] sm:$0xff]
    %v37 = vld [vmem:[%s1 + $0x40] sm:$0xff]
    %v38 = vld [vmem:[%s1 + $0x48] sm:$0xff]
    %v39 = vld [vmem:[%s1 + $0x50] sm:$0xff]
    %v40 = vld [vmem:[%s1 + $0x58] sm:$0xff]
    %v41 = vld [vmem:[%s1 + $0x60] sm:$0xff]
    %v42 = vld [vmem:[%s1 + $0x68] sm:$0xff]
    %v43 = vld [vmem:[%s1 + $0x70] sm:$0xff]
    %v44 = vld [vmem:[%s1 + $0x78] sm:$0xff]
    %v45 = vld [vmem:[%s1 + $0x80] sm:$0xff]
    %v46 = vld [vmem:[%s1 + $0x88] sm:$0xff]
    %v47 = vld [vmem:[%s1 + $0x90] sm:$0xff]
    %v48 = vld [vmem:[%s1 + $0x98] sm:$0xff]
    %v49 = vld [vmem:[%s1 + $0xa0] sm:$0xff]
    %v50 = vld [vmem:[%s1 + $0xa8] sm:$0xff]
    %v51 = vld [vmem:[%s1 + $0xb0] sm:$0xff]
    %v52 = vld [vmem:[%s1 + $0xb8] sm:$0xff]
    %v53 = vld [vmem:[%s1 + $0xc0] sm:$0xff]
    %v54 = vld [vmem:[%s1 + $0xc8] sm:$0xff]
    %v55 = vld [vmem:[%s1 + $0xd0] sm:$0xff]
    %v56 = vld [vmem:[%s1 + $0xd8] sm:$0xff]
    %v57 = vld [vmem:[%s1 + $0xe0] sm:$0xff]
    %v58 = vld [vmem:[%s1 + $0xe8] sm:$0xff]
    %v59 = vld [vmem:[%s1 + $0xf0] sm:$0xff]
    %v60 = vld [vmem:[%s1 + $0xf8] sm:$0xff]
    %v61 = vld [vmem:[%s2] sm:$0x1]
    %v63 = vlaneseq
    %v64 = vshrl.u32 %v63, 7
    %v65 = vsub.s32 0, %v64
    %v66 = vrot.slane %v61, %v65
    %68 = vmatprep.subr.mxu0 0.0
    %69 = vmatpush1.msra.mxu0 %v29
    %70 = vmatprep.subr.mxu0 0.0
    %71 = vmatpush1.msra.mxu0 %v30
    %72 = vmatprep.subr.mxu0 0.0
    %73 = vmatpush1.msra.mxu0 %v31
    %74 = vmatprep.subr.mxu0 0.0
    %75 = vmatpush1.msra.mxu0 %v32
    %76 = vmatprep.subr.mxu0 0.0
    %77 = vmatpush1.msra.mxu0 %v33
    %78 = vmatprep.subr.mxu0 0.0
    %79 = vmatpush1.msra.mxu0 %v34
    %80 = vmatprep.subr.mxu0 0.0
    %81 = vmatpush1.msra.mxu0 %v35
    %82 = vmatprep.subr.mxu0 0.0
    %83 = vmatpush1.msra.mxu0 %v36
    %84 = vmatprep.subr.mxu0 0.0
    %85 = vmatpush1.msra.mxu0 %v37
    %86 = vmatprep.subr.mxu0 0.0
    %87 = vmatpush1.msra.mxu0 %v38
    %88 = vmatprep.subr.mxu0 0.0
    %89 = vmatpush1.msra.mxu0 %v39
    %90 = vmatprep.subr.mxu0 0.0
    %91 = vmatpush1.msra.mxu0 %v40
    %92 = vmatprep.subr.mxu0 0.0
    %93 = vmatpush1.msra.mxu0 %v41
    %94 = vmatprep.subr.mxu0 0.0
    %95 = vmatpush1.msra.mxu0 %v42
    %96 = vmatprep.subr.mxu0 0.0
    %97 = vmatpush1.msra.mxu0 %v43
    %98 = vmatprep.subr.mxu0 0.0
    %99 = vmatpush1.msra.mxu0 %v44
    %100 = vmatprep.subr.mxu0 0.0
    %101 = vmatpush1.msra.mxu0 %v45
    %102 = vmatprep.subr.mxu0 0.0
    %103 = vmatpush1.msra.mxu0 %v46
    %104 = vmatprep.subr.mxu0 0.0
    %105 = vmatpush1.msra.mxu0 %v47
    %106 = vmatprep.subr.mxu0 0.0
    %107 = vmatpush1.msra.mxu0 %v48
    %108 = vmatprep.subr.mxu0 0.0
    %109 = vmatpush1.msra.mxu0 %v49
    %110 = vmatprep.subr.mxu0 0.0
    %111 = vmatpush1.msra.mxu0 %v50
    %112 = vmatprep.subr.mxu0 0.0
    %113 = vmatpush1.msra.mxu0 %v51
    %114 = vmatprep.subr.mxu0 0.0
    %115 = vmatpush1.msra.mxu0 %v52
    %116 = vmatprep.subr.mxu0 0.0
    %117 = vmatpush1.msra.mxu0 %v53
    %118 = vmatprep.subr.mxu0 0.0
    %119 = vmatpush1.msra.mxu0 %v54
    %120 = vmatprep.subr.mxu0 0.0
    %121 = vmatpush1.msra.mxu0 %v55
    %122 = vmatprep.subr.mxu0 0.0
    %123 = vmatpush1.msra.mxu0 %v56
    %124 = vmatprep.subr.mxu0 0.0
    %125 = vmatpush1.msra.mxu0 %v57
    %126 = vmatprep.subr.mxu0 0.0
    %127 = vmatpush1.msra.mxu0 %v58
    %128 = vmatprep.subr.mxu0 0.0
    %129 = vmatpush1.msra.mxu0 %v59
    %130 = vmatprep.subr.mxu0 0.0
    %131 = vmatpush1.msra.mxu0 %v60
    %132 = vmatprep.mubr.f32.mxu0 %v28
    %133 = vmatmul.mubr.f32.gmra.mrb[0].mxu0 %v27
    %v134 = vpop.f32.mrb[0].mxu0
    %v135 = vadd.f32 %v66, %v134
    %v136 = vpop.f32.mrb[0].mxu0
    %137 = vdwg.mxu0
    %v138 = vmax.f32 %v135, 0.0
    %v139 = vld [vmem:[%s3] sm:$0xff]
    %v140 = vld [vmem:[%s3 + $0x8] sm:$0xff]
    %v141 = vld [vmem:[%s3 + $0x10] sm:$0xff]
    %v142 = vld [vmem:[%s3 + $0x18] sm:$0xff]
    %v143 = vld [vmem:[%s3 + $0x20] sm:$0xff]
    %v144 = vld [vmem:[%s3 + $0x28] sm:$0xff]
    %v145 = vld [vmem:[%s3 + $0x30] sm:$0xff]
    %v146 = vld [vmem:[%s3 + $0x38] sm:$0xff]
    %v147 = vld [vmem:[%s4] sm:$0x1]
    %v149 = vlaneseq
    %v150 = vshrl.u32 %v149, 7
    %v151 = vsub.s32 0, %v150
    %v152 = vrot.slane %v147, %v151
    %vm154 = vcmask 523264
    %v156 = vsel %vm154, %v138, 0
    %158 = vmatprep.subr.mxu0 0.0
    %159 = vmatpush1.msra.mxu0 %v139
    %160 = vmatprep.subr.mxu0 0.0
    %161 = vmatpush1.msra.mxu0 %v140
    %162 = vmatprep.subr.mxu0 0.0
    %163 = vmatpush1.msra.mxu0 %v141
    %164 = vmatprep.subr.mxu0 0.0
    %165 = vmatpush1.msra.mxu0 %v142
    %166 = vmatprep.subr.mxu0 0.0
    %167 = vmatpush1.msra.mxu0 %v143
    %168 = vmatprep.subr.mxu0 0.0
    %169 = vmatpush1.msra.mxu0 %v144
    %170 = vmatprep.subr.mxu0 0.0
    %171 = vmatpush1.msra.mxu0 %v145
    %172 = vmatprep.subr.mxu0 0.0
    %173 = vmatpush1.msra.mxu0 %v146
    %174 = vmatprep.subr.mxu0 0.0
    %175 = vmatpush1.msra.mxu0 0.0
    %176 = vmatprep.subr.mxu0 0.0
    %177 = vmatpush1.msra.mxu0 0.0
    %178 = vmatprep.subr.mxu0 0.0
    %179 = vmatpush1.msra.mxu0 0.0
    %180 = vmatprep.subr.mxu0 0.0
    %181 = vmatpush1.msra.mxu0 0.0
    %182 = vmatprep.subr.mxu0 0.0
    %183 = vmatpush1.msra.mxu0 0.0
    %184 = vmatprep.subr.mxu0 0.0
    %185 = vmatpush1.msra.mxu0 0.0
    %186 = vmatprep.subr.mxu0 0.0
    %187 = vmatpush1.msra.mxu0 0.0
    %188 = vmatprep.subr.mxu0 0.0
    %189 = vmatpush1.msra.mxu0 0.0
    %190 = vmatprep.subr.mxu0 0.0
    %191 = vmatpush1.msra.mxu0 0.0
    %192 = vmatprep.subr.mxu0 0.0
    %193 = vmatpush1.msra.mxu0 0.0
    %194 = vmatprep.subr.mxu0 0.0
    %195 = vmatpush1.msra.mxu0 0.0
    %196 = vmatprep.subr.mxu0 0.0
    %197 = vmatpush1.msra.mxu0 0.0
    %198 = vmatprep.subr.mxu0 0.0
    %199 = vmatpush1.msra.mxu0 0.0
    %200 = vmatprep.subr.mxu0 0.0
    %201 = vmatpush1.msra.mxu0 0.0
    %202 = vmatprep.subr.mxu0 0.0
    %203 = vmatpush1.msra.mxu0 0.0
    %204 = vmatprep.subr.mxu0 0.0
    %205 = vmatpush1.msra.mxu0 0.0
    %206 = vmatprep.subr.mxu0 0.0
    %207 = vmatpush1.msra.mxu0 0.0
    %208 = vmatprep.subr.mxu0 0.0
    %209 = vmatpush1.msra.mxu0 0.0
    %210 = vmatprep.subr.mxu0 0.0
    %211 = vmatpush1.msra.mxu0 0.0
    %212 = vmatprep.subr.mxu0 0.0
    %213 = vmatpush1.msra.mxu0 0.0
    %214 = vmatprep.subr.mxu0 0.0
    %215 = vmatpush1.msra.mxu0 0.0
    %216 = vmatprep.subr.mxu0 0.0
    %217 = vmatpush1.msra.mxu0 0.0
    %218 = vmatprep.subr.mxu0 0.0
    %219 = vmatpush1.msra.mxu0 0.0
    %220 = vmatprep.subr.mxu0 0.0
    %221 = vmatpush1.msra.mxu0 0.0
    %222 = vmatprep.mubr.f32.mxu0 0.0
    %223 = vmatmul.mubr.f32.gmra.mrb[0].mxu0 %v156
    %v224 = vpop.f32.mrb[0].mxu0
    %v225 = vadd.f32 %v152, %v224
    %v226 = vpop.f32.mrb[0].mxu0
    %227 = vdwg.mxu0
    %v228 = vmax.f32 %v225, 0.0
    %v229 = vld [vmem:[%s5] sm:$0xff]
    %v230 = vld [vmem:[%s5 + $0x8] sm:$0xff]
    %v231 = vld [vmem:[%s5 + $0x10] sm:$0xff]
    %v232 = vld [vmem:[%s5 + $0x18] sm:$0xff]
    %v233 = vld [vmem:[%s6] sm:$0x1]
    %v235 = vlaneseq
    %v236 = vshrl.u32 %v235, 7
    %v237 = vsub.s32 0, %v236
    %v238 = vrot.slane %v233, %v237
    %vm240 = vcmask 261120
    %v242 = vsel %vm240, %v228, 0
    %244 = vmatprep.subr.mxu0 0.0
    %245 = vmatpush1.msra.mxu0 %v229
    %246 = vmatprep.subr.mxu0 0.0
    %247 = vmatpush1.msra.mxu0 %v230
    %248 = vmatprep.subr.mxu0 0.0
    %249 = vmatpush1.msra.mxu0 %v231
    %250 = vmatprep.subr.mxu0 0.0
    %251 = vmatpush1.msra.mxu0 %v232
    %252 = vmatprep.subr.mxu0 0.0
    %253 = vmatpush1.msra.mxu0 0.0
    %254 = vmatprep.subr.mxu0 0.0
    %255 = vmatpush1.msra.mxu0 0.0
    %256 = vmatprep.subr.mxu0 0.0
    %257 = vmatpush1.msra.mxu0 0.0
    %258 = vmatprep.subr.mxu0 0.0
    %259 = vmatpush1.msra.mxu0 0.0
    %260 = vmatprep.subr.mxu0 0.0
    %261 = vmatpush1.msra.mxu0 0.0
    %262 = vmatprep.subr.mxu0 0.0
    %263 = vmatpush1.msra.mxu0 0.0
    %264 = vmatprep.subr.mxu0 0.0
    %265 = vmatpush1.msra.mxu0 0.0
    %266 = vmatprep.subr.mxu0 0.0
    %267 = vmatpush1.msra.mxu0 0.0
    %268 = vmatprep.subr.mxu0 0.0
    %269 = vmatpush1.msra.mxu0 0.0
    %270 = vmatprep.subr.mxu0 0.0
    %271 = vmatpush1.msra.mxu0 0.0
    %272 = vmatprep.subr.mxu0 0.0
    %273 = vmatpush1.msra.mxu0 0.0
    %274 = vmatprep.subr.mxu0 0.0
    %275 = vmatpush1.msra.mxu0 0.0
    %276 = vmatprep.subr.mxu0 0.0
    %277 = vmatpush1.msra.mxu0 0.0
    %278 = vmatprep.subr.mxu0 0.0
    %279 = vmatpush1.msra.mxu0 0.0
    %280 = vmatprep.subr.mxu0 0.0
    %281 = vmatpush1.msra.mxu0 0.0
    %282 = vmatprep.subr.mxu0 0.0
    %283 = vmatpush1.msra.mxu0 0.0
    %284 = vmatprep.subr.mxu0 0.0
    %285 = vmatpush1.msra.mxu0 0.0
    %286 = vmatprep.subr.mxu0 0.0
    %287 = vmatpush1.msra.mxu0 0.0
    %288 = vmatprep.subr.mxu0 0.0
    %289 = vmatpush1.msra.mxu0 0.0
    %290 = vmatprep.subr.mxu0 0.0
    %291 = vmatpush1.msra.mxu0 0.0
    %292 = vmatprep.subr.mxu0 0.0
    %293 = vmatpush1.msra.mxu0 0.0
    %294 = vmatprep.subr.mxu0 0.0
    %295 = vmatpush1.msra.mxu0 0.0
    %296 = vmatprep.subr.mxu0 0.0
    %297 = vmatpush1.msra.mxu0 0.0
    %298 = vmatprep.subr.mxu0 0.0
    %299 = vmatpush1.msra.mxu0 0.0
    %300 = vmatprep.subr.mxu0 0.0
    %301 = vmatpush1.msra.mxu0 0.0
    %302 = vmatprep.subr.mxu0 0.0
    %303 = vmatpush1.msra.mxu0 0.0
    %304 = vmatprep.subr.mxu0 0.0
    %305 = vmatpush1.msra.mxu0 0.0
    %306 = vmatprep.subr.mxu0 0.0
    %307 = vmatpush1.msra.mxu0 0.0
    %308 = vmatprep.mubr.f32.mxu0 0.0
    %309 = vmatmul.mubr.f32.gmra.mrb[0].mxu0 %v242
    %v310 = vpop.f32.mrb[0].mxu0
    %v311 = vadd.f32 %v238, %v310
    %v312 = vpop.f32.mrb[0].mxu0
    %313 = vdwg.mxu0
    %vm314 = vcmask 130048
    %315 = vst.msk [vmem:[#allocation2] sm:$0xff] %vm314, %v311
    // Predicated region
    $region30: #{tpu_custom_call.1} parent=1 // pred_check
      _
    $region31: #{tpu_custom_call.1} parent=1 // pred_check_branch
      %317 = sbr.rel (0) target = $region33
    $region32: #{tpu_custom_call.1} parent=1 // pred_region
      %s319 = ssub.s32 128, 128
      %320 = vsyncadd [#allocation3], %s319
      %s322 = sshll.u32 [#allocation2], 4
      %s323 = int_to_ptr.vmem [resolvable:$true] %s322
      %325 = dma.vmem_to_hbm [thread:$0]  %s323, 128, %s7, [#allocation3]
    $region33: #{tpu_custom_call.1} parent=1 // pred_fallthru
      _
    // Predicated region
    $region34: #{tpu_custom_call.1} parent=1 // pred_check
      _
    $region35: #{tpu_custom_call.1} parent=1 // pred_check_branch
      %327 = sbr.rel (0) target = $region37
    $region36: #{tpu_custom_call.1} parent=1 // pred_region
      %328 = dma.done [#allocation3], 128
    $region37: #{tpu_custom_call.1} parent=1 // pred_fallthru
      _
    %329 = vsyncpa [#allocation3], 1

</llo_original>
